<compile_context>
chip_gen: v7x
topology: tpu7x:2x2x1
jax: 0.10.0
libtpu: 0.0.40
codegen_flags: <defaults>
</compile_context>

<pallas_src>
import jax
import jax.numpy as jnp
from jax import lax
from jax.experimental import pallas as pl
from jax.experimental.pallas import tpu as pltpu


_VMEM_LIMIT = 48 * 1024 * 1024  # explicit scoped-VMEM budget, fits v7x (64 MiB phys)


def _pick_tile(dim, target):
    """Largest tile <= target that divides `dim` (keeps BlockSpecs legal)."""
    t = min(target, dim)
    while dim % t:
        t -= 1
    return t


# ---------------------------------------------------------------------------
# Fused QKV projection kernel: reads x once, writes q, k, v.
# ---------------------------------------------------------------------------
def _qkv_kernel(x_ref, wq_ref, wk_ref, wv_ref, qb_ref, vb_ref,
                q_ref, k_ref, v_ref):
    x = x_ref[...]                                             # (tm, Cin)
    q = jnp.dot(x, wq_ref[...], preferred_element_type=jnp.float32)
    q_ref[...] = (q + qb_ref[...].astype(jnp.float32)).astype(q_ref.dtype)
    k = jnp.dot(x, wk_ref[...], preferred_element_type=jnp.float32)
    k_ref[...] = k.astype(k_ref.dtype)                         # k has no bias
    v = jnp.dot(x, wv_ref[...], preferred_element_type=jnp.float32)
    v_ref[...] = (v + vb_ref[...].astype(jnp.float32)).astype(v_ref.dtype)


def pallas_qkv_proj(x2d, wq, wk, wv, q_bias, v_bias, *, row_tile=256):
    """x2d: (M, Cin); wq/wk/wv: (Cin, AHD) pre-transposed; biases: (AHD,)."""
    M, Cin = x2d.shape
    AHD = wq.shape[1]
    tm = _pick_tile(M, row_tile)
    qb = q_bias.reshape(1, AHD)
    vb = v_bias.reshape(1, AHD)

    act_spec_in = pl.BlockSpec((tm, Cin), lambda i: (i, 0))
    w_spec = pl.BlockSpec((Cin, AHD), lambda i: (0, 0))
    b_spec = pl.BlockSpec((1, AHD), lambda i: (0, 0))
    out_spec = pl.BlockSpec((tm, AHD), lambda i: (i, 0))

    out_shape = tuple(jax.ShapeDtypeStruct((M, AHD), x2d.dtype) for _ in range(3))
    return pl.pallas_call(
        _qkv_kernel,
        out_shape=out_shape,
        grid=(M // tm,),
        in_specs=[act_spec_in, w_spec, w_spec, w_spec, b_spec, b_spec],
        out_specs=(out_spec, out_spec, out_spec),
        compiler_params=pltpu.CompilerParams(
            dimension_semantics=("parallel",),
            vmem_limit_bytes=_VMEM_LIMIT,
        ),
    )(x2d, wq, wk, wv, qb, vb)


# ---------------------------------------------------------------------------
# Generic tiled linear (used for the output projection).
# ---------------------------------------------------------------------------
def _linear_kernel(x_ref, w_ref, b_ref, o_ref):
    y = jnp.dot(x_ref[...], w_ref[...], preferred_element_type=jnp.float32)
    o_ref[...] = (y + b_ref[...].astype(jnp.float32)).astype(o_ref.dtype)


def pallas_linear(x2d, w, b, *, row_tile=256):
    """x2d: (M, Cin); w: (Cin, Cout) pre-transposed; b: (Cout,)."""
    M, Cin = x2d.shape
    Cout = w.shape[1]
    tm = _pick_tile(M, row_tile)
    b2 = b.reshape(1, Cout)
    return pl.pallas_call(
        _linear_kernel,
        out_shape=jax.ShapeDtypeStruct((M, Cout), x2d.dtype),
        grid=(M // tm,),
        in_specs=[
            pl.BlockSpec((tm, Cin), lambda i: (i, 0)),
            pl.BlockSpec((Cin, Cout), lambda i: (0, 0)),
            pl.BlockSpec((1, Cout), lambda i: (0, 0)),
        ],
        out_specs=pl.BlockSpec((tm, Cout), lambda i: (i, 0)),
        compiler_params=pltpu.CompilerParams(
            dimension_semantics=("parallel",),
            vmem_limit_bytes=_VMEM_LIMIT,
        ),
    )(x2d, w, b2)


# ---------------------------------------------------------------------------
# Flash-style attention (online softmax, tiled over q and kv).
# qk_scale is already folded into the q projection, so no scaling here.
# ---------------------------------------------------------------------------
def _flash_attn_kernel(q_ref, k_ref, v_ref, o_ref, m_sc, l_sc, acc_sc):
    ki = pl.program_id(3)

    @pl.when(ki == 0)
    def _init():
        m_sc[...] = jnp.full(m_sc.shape, -jnp.inf, jnp.float32)
        l_sc[...] = jnp.zeros(l_sc.shape, jnp.float32)
        acc_sc[...] = jnp.zeros(acc_sc.shape, jnp.float32)

    q = q_ref[0, 0]                                            # (tq, D), model dtype
    k = k_ref[0, 0]                                            # (tkv, D)
    v = v_ref[0, 0]                                            # (tkv, D)

    # q @ k^T without materializing a transpose: contract the last dims.
    s = lax.dot_general(q, k, dimension_numbers=(((1,), (1,)), ((), ())),
                        preferred_element_type=jnp.float32)    # (tq, tkv)

    m_prev = m_sc[...]
    m_new = jnp.maximum(m_prev, jnp.max(s, axis=-1, keepdims=True))
    alpha = jnp.exp(m_prev - m_new)
    p = jnp.exp(s - m_new)
    l_sc[...] = alpha * l_sc[...] + jnp.sum(p, axis=-1, keepdims=True)
    acc_sc[...] = alpha * acc_sc[...] + jnp.dot(
        p.astype(v.dtype), v, preferred_element_type=jnp.float32)
    m_sc[...] = m_new

    @pl.when(ki == pl.num_programs(3) - 1)
    def _finalize():
        inv_l = pl.reciprocal(l_sc[...], approx=True)          # EUP slot, ~free
        o_ref[0, 0] = (acc_sc[...] * inv_l).astype(o_ref.dtype)


def pallas_flash_attention(q, k, v, *, q_tile=256, kv_tile=256):
    """q, k, v: (B, nH, N, D) -> (B, nH, N, D). Scale already folded into q."""
    B, nH, N, D = q.shape
    tq = _pick_tile(N, q_tile)
    tkv = _pick_tile(N, kv_tile)

    q_spec = pl.BlockSpec((1, 1, tq, D), lambda b, h, qi, ki: (b, h, qi, 0))
    kv_spec = pl.BlockSpec((1, 1, tkv, D), lambda b, h, qi, ki: (b, h, ki, 0))
    o_spec = pl.BlockSpec((1, 1, tq, D), lambda b, h, qi, ki: (b, h, qi, 0))

    return pl.pallas_call(
        _flash_attn_kernel,
        out_shape=jax.ShapeDtypeStruct((B, nH, N, D), q.dtype),
        grid=(B, nH, N // tq, N // tkv),
        in_specs=[q_spec, kv_spec, kv_spec],
        out_specs=o_spec,
        scratch_shapes=[
            pltpu.VMEM((tq, 1), jnp.float32),   # running max m
            pltpu.VMEM((tq, 1), jnp.float32),   # running sum l
            pltpu.VMEM((tq, D), jnp.float32),   # output accumulator
        ],
        compiler_params=pltpu.CompilerParams(
            dimension_semantics=("parallel", "parallel", "parallel", "arbitrary"),
            vmem_limit_bytes=_VMEM_LIMIT,
        ),
    )(q, k, v)


# ---------------------------------------------------------------------------
# Module wrapper (glue in plain JAX: reshapes / head split / param setup)
# ---------------------------------------------------------------------------
def init_attention_params(key, dim, num_heads, attn_head_dim=None,
                          dtype=jnp.float32):
    head_dim = dim // num_heads if attn_head_dim is None else attn_head_dim
    all_head_dim = head_dim * num_heads
    ks = jax.random.split(key, 7)
    s = 0.02
    params = {
        # stored as (in, out) == PyTorch weight.T
        "wq": (s * jax.random.normal(ks[0], (dim, all_head_dim))).astype(dtype),
        "wk": (s * jax.random.normal(ks[1], (dim, all_head_dim))).astype(dtype),
        "wv": (s * jax.random.normal(ks[2], (dim, all_head_dim))).astype(dtype),
        "wp": (s * jax.random.normal(ks[3], (all_head_dim, dim))).astype(dtype),
        # module inits q_bias/v_bias to zeros; randomized here to exercise bias path
        "q_bias": (0.05 * jax.random.normal(ks[4], (all_head_dim,))).astype(dtype),
        "v_bias": (0.05 * jax.random.normal(ks[5], (all_head_dim,))).astype(dtype),
        "p_bias": (s * jax.random.normal(ks[6], (dim,))).astype(dtype),
    }
    return params, head_dim, all_head_dim


def attention_forward(x, params, num_heads, head_dim, qk_scale=None):
    B, H, W, C = x.shape
    N = H * W
    all_head_dim = num_heads * head_dim
    scale = qk_scale if qk_scale is not None else head_dim ** (-0.5)

    xf = x.reshape(B * N, C)

    # Fold qk_scale into the q projection (zero runtime cost in the kernels).
    wq_s = (params["wq"] * scale).astype(x.dtype)
    qb_s = (params["q_bias"] * scale).astype(x.dtype)

    # Fused q/k/v projection: x is read from HBM once.
    q, k, v = pallas_qkv_proj(xf, wq_s, params["wk"], params["wv"],
                              qb_s, params["v_bias"])

    # (B*N, nH*D) -> (B, nH, N, D)  (head split; rope(q), rope(k) = identity).
    def to_heads(t):
        return t.reshape(B, N, num_heads, head_dim).transpose(0, 2, 1, 3)

    q, k, v = to_heads(q), to_heads(k), to_heads(v)

    # Flash attention with online softmax (scale already applied to q).
    o = pallas_flash_attention(q, k, v)                        # (B, nH, N, D)

    # (B, nH, N, D) -> (B*N, nH*D)
    o = o.transpose(0, 2, 1, 3).reshape(B * N, all_head_dim)

    # Output projection (with bias).
    o = pallas_linear(o, params["wp"], params["p_bias"])       # (B*N, C)
    return o.reshape(B, H, W, C)


# ---------------------------------------------------------------------------
# Pure-JAX reference (for sanity) and demo
# ---------------------------------------------------------------------------
def attention_reference(x, params, num_heads, head_dim, qk_scale=None):
    B, H, W, C = x.shape
    N = H * W
    scale = qk_scale if qk_scale is not None else head_dim ** (-0.5)
    xf = x.reshape(B, N, C)
    q = xf @ params["wq"] + params["q_bias"]
    k = xf @ params["wk"]
    v = xf @ params["wv"] + params["v_bias"]
    q = q.reshape(B, N, num_heads, head_dim).transpose(0, 2, 1, 3)
    k = k.reshape(B, N, num_heads, head_dim).transpose(0, 2, 1, 3)
    v = v.reshape(B, N, num_heads, head_dim).transpose(0, 2, 1, 3)
    attn = (q * scale) @ jnp.swapaxes(k, -2, -1)
    attn = jax.nn.softmax(attn, axis=-1)
    o = (attn @ v).transpose(0, 2, 1, 3).reshape(B, N, -1)
    o = o @ params["wp"] + params["p_bias"]
    return o.reshape(B, H, W, C)


if __name__ == "__main__":
    key = jax.random.PRNGKey(0)
    k_x, k_p = jax.random.split(key)

    # Small shapes consistent with the module: x is (B, H, W, C=dim)
    B, H, W, C = 2, 8, 8, 32
    num_heads = 4

    params, head_dim, all_head_dim = init_attention_params(k_p, C, num_heads)
    x = jax.random.normal(k_x, (B, H, W, C), dtype=jnp.float32)

    out = attention_forward(x, params, num_heads, head_dim)
    out = jax.block_until_ready(out)

    ref = attention_reference(x, params, num_heads, head_dim)
    assert out.shape == (B, H, W, C)
    max_err = float(jnp.max(jnp.abs(out - ref)))
    assert jnp.allclose(out, ref, atol=1e-3, rtol=1e-3), max_err
    print("KERNEL_OK")
</pallas_src>

<mosaic_0001>
module attributes {stable_mosaic.version = 11 : i64} {
  func.func @_qkv_kernel(%arg0: i32, %arg1: memref<128x32xf32, #tpu.memory_space<vmem>>, %arg2: memref<32x32xf32, #tpu.memory_space<vmem>>, %arg3: memref<32x32xf32, #tpu.memory_space<vmem>>, %arg4: memref<32x32xf32, #tpu.memory_space<vmem>>, %arg5: memref<1x32xf32, #tpu.memory_space<vmem>>, %arg6: memref<1x32xf32, #tpu.memory_space<vmem>>, %arg7: memref<128x32xf32, #tpu.memory_space<vmem>>, %arg8: memref<128x32xf32, #tpu.memory_space<vmem>>, %arg9: memref<128x32xf32, #tpu.memory_space<vmem>>) attributes {dimension_semantics = [#tpu.dimension_semantics<parallel>], iteration_bounds = array<i64: 1>, scalar_prefetch = 0 : i64, scratch_operands = 0 : i64, tpu.core_type = #tpu.core_type<tc>, window_params = [{transform_indices = @transform_0, window_bounds = array<i64: 128, 32>}, {pipeline_mode = #tpu.pipeline_mode<synchronous>, transform_indices = @transform_1, window_bounds = array<i64: 32, 32>}, {pipeline_mode = #tpu.pipeline_mode<synchronous>, transform_indices = @transform_2, window_bounds = array<i64: 32, 32>}, {pipeline_mode = #tpu.pipeline_mode<synchronous>, transform_indices = @transform_3, window_bounds = array<i64: 32, 32>}, {pipeline_mode = #tpu.pipeline_mode<synchronous>, transform_indices = @transform_4, window_bounds = array<i64: 1, 32>}, {pipeline_mode = #tpu.pipeline_mode<synchronous>, transform_indices = @transform_5, window_bounds = array<i64: 1, 32>}, {transform_indices = @transform_6, window_bounds = array<i64: 128, 32>}, {transform_indices = @transform_7, window_bounds = array<i64: 128, 32>}, {transform_indices = @transform_8, window_bounds = array<i64: 128, 32>}]} {
    %c0 = arith.constant 0 : index
    %c0_0 = arith.constant 0 : index
    %0 = vector.load %arg1[%c0, %c0_0] : memref<128x32xf32, #tpu.memory_space<vmem>>, vector<128x32xf32>
    %c0_1 = arith.constant 0 : index
    %c0_2 = arith.constant 0 : index
    %1 = vector.load %arg2[%c0_1, %c0_2] : memref<32x32xf32, #tpu.memory_space<vmem>>, vector<32x32xf32>
    %cst = arith.constant dense<0.000000e+00> : vector<128x32xf32>
    %2 = tpu.matmul %0, %1, %cst {dimension_numbers = #tpu.dot_dimension_numbers<[1], [0], [0], [1], [0, 0, 1, 1], [], []>} : vector<128x32xf32>, vector<32x32xf32>, vector<128x32xf32> -> vector<128x32xf32>
    %c0_3 = arith.constant 0 : index
    %c0_4 = arith.constant 0 : index
    %3 = vector.load %arg5[%c0_3, %c0_4] : memref<1x32xf32, #tpu.memory_space<vmem>>, vector<1x32xf32>
    %4 = vector.broadcast %3 : vector<1x32xf32> to vector<128x32xf32>
    %5 = arith.addf %2, %4 : vector<128x32xf32>
    %c0_5 = arith.constant 0 : index
    %c0_6 = arith.constant 0 : index
    %6 = vector.load %arg7[%c0_5, %c0_6] : memref<128x32xf32, #tpu.memory_space<vmem>>, vector<128x32xf32>
    tpu.vector_store %arg7[%c0_5, %c0_6], %5 {strides = array<i32>} : memref<128x32xf32, #tpu.memory_space<vmem>>, vector<128x32xf32>,
    %c0_7 = arith.constant 0 : index
    %c0_8 = arith.constant 0 : index
    %7 = vector.load %arg3[%c0_7, %c0_8] : memref<32x32xf32, #tpu.memory_space<vmem>>, vector<32x32xf32>
    %cst_9 = arith.constant dense<0.000000e+00> : vector<128x32xf32>
    %8 = tpu.matmul %0, %7, %cst_9 {dimension_numbers = #tpu.dot_dimension_numbers<[1], [0], [0], [1], [0, 0, 1, 1], [], []>} : vector<128x32xf32>, vector<32x32xf32>, vector<128x32xf32> -> vector<128x32xf32>
    %c0_10 = arith.constant 0 : index
    %c0_11 = arith.constant 0 : index
    %9 = vector.load %arg8[%c0_10, %c0_11] : memref<128x32xf32, #tpu.memory_space<vmem>>, vector<128x32xf32>
    tpu.vector_store %arg8[%c0_10, %c0_11], %8 {strides = array<i32>} : memref<128x32xf32, #tpu.memory_space<vmem>>, vector<128x32xf32>,
    %c0_12 = arith.constant 0 : index
    %c0_13 = arith.constant 0 : index
    %10 = vector.load %arg4[%c0_12, %c0_13] : memref<32x32xf32, #tpu.memory_space<vmem>>, vector<32x32xf32>
    %cst_14 = arith.constant dense<0.000000e+00> : vector<128x32xf32>
    %11 = tpu.matmul %0, %10, %cst_14 {dimension_numbers = #tpu.dot_dimension_numbers<[1], [0], [0], [1], [0, 0, 1, 1], [], []>} : vector<128x32xf32>, vector<32x32xf32>, vector<128x32xf32> -> vector<128x32xf32>
    %c0_15 = arith.constant 0 : index
    %c0_16 = arith.constant 0 : index
    %12 = vector.load %arg6[%c0_15, %c0_16] : memref<1x32xf32, #tpu.memory_space<vmem>>, vector<1x32xf32>
    %13 = vector.broadcast %12 : vector<1x32xf32> to vector<128x32xf32>
    %14 = arith.addf %11, %13 : vector<128x32xf32>
    %c0_17 = arith.constant 0 : index
    %c0_18 = arith.constant 0 : index
    %15 = vector.load %arg9[%c0_17, %c0_18] : memref<128x32xf32, #tpu.memory_space<vmem>>, vector<128x32xf32>
    tpu.vector_store %arg9[%c0_17, %c0_18], %14 {strides = array<i32>} : memref<128x32xf32, #tpu.memory_space<vmem>>, vector<128x32xf32>,
    return
  }
  func.func @transform_0(%arg0: i32) -> (i32, i32) {
    %c0_i32 = arith.constant 0 : i32
    %c0_i32_0 = arith.constant 0 : i32
    return %arg0, %c0_i32 : i32, i32
  }
  func.func @transform_1(%arg0: i32) -> (i32, i32) {
    %c0_i32 = arith.constant 0 : i32
    %c0_i32_0 = arith.constant 0 : i32
    %c0_i32_1 = arith.constant 0 : i32
    return %c0_i32, %c0_i32_0 : i32, i32
  }
  func.func @transform_2(%arg0: i32) -> (i32, i32) {
    %c0_i32 = arith.constant 0 : i32
    %c0_i32_0 = arith.constant 0 : i32
    %c0_i32_1 = arith.constant 0 : i32
    return %c0_i32, %c0_i32_0 : i32, i32
  }
  func.func @transform_3(%arg0: i32) -> (i32, i32) {
    %c0_i32 = arith.constant 0 : i32
    %c0_i32_0 = arith.constant 0 : i32
    %c0_i32_1 = arith.constant 0 : i32
    return %c0_i32, %c0_i32_0 : i32, i32
  }
  func.func @transform_4(%arg0: i32) -> (i32, i32) {
    %c0_i32 = arith.constant 0 : i32
    %c0_i32_0 = arith.constant 0 : i32
    %c0_i32_1 = arith.constant 0 : i32
    return %c0_i32, %c0_i32_0 : i32, i32
  }
  func.func @transform_5(%arg0: i32) -> (i32, i32) {
    %c0_i32 = arith.constant 0 : i32
    %c0_i32_0 = arith.constant 0 : i32
    %c0_i32_1 = arith.constant 0 : i32
    return %c0_i32, %c0_i32_0 : i32, i32
  }
  func.func @transform_6(%arg0: i32) -> (i32, i32) {
    %c0_i32 = arith.constant 0 : i32
    %c0_i32_0 = arith.constant 0 : i32
    return %arg0, %c0_i32 : i32, i32
  }
  func.func @transform_7(%arg0: i32) -> (i32, i32) {
    %c0_i32 = arith.constant 0 : i32
    %c0_i32_0 = arith.constant 0 : i32
    return %arg0, %c0_i32 : i32, i32
  }
  func.func @transform_8(%arg0: i32) -> (i32, i32) {
    %c0_i32 = arith.constant 0 : i32
    %c0_i32_0 = arith.constant 0 : i32
    return %arg0, %c0_i32 : i32, i32
  }
}

</mosaic_0001>

<llo_original>
// kernel: tpu_custom_call.1
$region0: #{tpu_custom_call.1}
  #allocation0 [shape = 'u32[]', space=smem, size = 0x4, offset = 0x4, fixed_abs, tag = 'smem constant byte address 0x4 - core index']
  #allocation1 [shape = 'u32[144,128]{1,0:T(1,128)}', space=vmem, size = 0x12000, scoped, tag = 'internal scratch']
  %s0 = inlined_call_operand.vmem [shape: f32[128,32], index: 0, kind: input, shape index: {}]
  %s1 = inlined_call_operand.vmem [shape: f32[32,32], index: 1, kind: input, shape index: {}]
  %s2 = inlined_call_operand.vmem [shape: f32[32,32], index: 2, kind: input, shape index: {}]
  %s3 = inlined_call_operand.vmem [shape: f32[32,32], index: 3, kind: input, shape index: {}]
  %s4 = inlined_call_operand.vmem [shape: f32[1,32], index: 4, kind: input, shape index: {}]
  %s5 = inlined_call_operand.vmem [shape: f32[1,32], index: 5, kind: input, shape index: {}]
  %s6 = inlined_call_operand.vmem [shape: f32[128,32], index: 6, kind: output, shape index: {0}]
  %s7 = inlined_call_operand.vmem [shape: f32[128,32], index: 7, kind: output, shape index: {1}]
  %s8 = inlined_call_operand.vmem [shape: f32[128,32], index: 8, kind: output, shape index: {2}]
  %9 = xla_tuple %s6, %s7, %s8
  %s10 = sld [smem:[#allocation0]]
  $region50: #{tpu_custom_call.1} parent=0
    _
  %s12 = ssub.s32 1, %s10
  %s13 = scalar_select 0, %s12, %s10
  // Predicated region
  $region2: #{tpu_custom_call.1} parent=0 // pred_check
    _
  $region3: #{tpu_custom_call.1} parent=0 // pred_check_branch
    %15 = sbr.rel (0) target = $region5
  $region4: #{tpu_custom_call.1} parent=0 // pred_region
    _
  $region5: #{tpu_custom_call.1} parent=0 // pred_fallthru
    _
  // Predicated region
  $region6: #{tpu_custom_call.1} parent=0 // pred_check
    _
  $region7: #{tpu_custom_call.1} parent=0 // pred_check_branch
    %17 = sbr.rel (0) target = $region9
  $region8: #{tpu_custom_call.1} parent=0 // pred_region
    _
  $region9: #{tpu_custom_call.1} parent=0 // pred_fallthru
    _
  // Predicated region
  $region10: #{tpu_custom_call.1} parent=0 // pred_check
    _
  $region11: #{tpu_custom_call.1} parent=0 // pred_check_branch
    %19 = sbr.rel (0) target = $region13
  $region12: #{tpu_custom_call.1} parent=0 // pred_region
    _
  $region13: #{tpu_custom_call.1} parent=0 // pred_fallthru
    _
  // Predicated region
  $region14: #{tpu_custom_call.1} parent=0 // pred_check
    _
  $region15: #{tpu_custom_call.1} parent=0 // pred_check_branch
    %21 = sbr.rel (0) target = $region17
  $region16: #{tpu_custom_call.1} parent=0 // pred_region
    _
  $region17: #{tpu_custom_call.1} parent=0 // pred_fallthru
    _
  // Predicated region
  $region18: #{tpu_custom_call.1} parent=0 // pred_check
    _
  $region19: #{tpu_custom_call.1} parent=0 // pred_check_branch
    %23 = sbr.rel (0) target = $region21
  $region20: #{tpu_custom_call.1} parent=0 // pred_region
    _
  $region21: #{tpu_custom_call.1} parent=0 // pred_fallthru
    _
  // Predicated region
  $region22: #{tpu_custom_call.1} parent=0 // pred_check
    _
  $region23: #{tpu_custom_call.1} parent=0 // pred_check_branch
    %25 = sbr.rel (0) target = $region25
  $region24: #{tpu_custom_call.1} parent=0 // pred_region
    _
  $region25: #{tpu_custom_call.1} parent=0 // pred_fallthru
    _
  %v26 = vld [vmem:[%s0] sm:$0xff]
  %v27 = vld [vmem:[%s0 + $0x8] sm:$0xff]
  %v28 = vld [vmem:[%s0 + $0x10] sm:$0xff]
  %v29 = vld [vmem:[%s0 + $0x18] sm:$0xff]
  %v30 = vld [vmem:[%s0 + $0x20] sm:$0xff]
  %v31 = vld [vmem:[%s0 + $0x28] sm:$0xff]
  %v32 = vld [vmem:[%s0 + $0x30] sm:$0xff]
  %v33 = vld [vmem:[%s0 + $0x38] sm:$0xff]
  %v34 = vld [vmem:[%s0 + $0x40] sm:$0xff]
  %v35 = vld [vmem:[%s0 + $0x48] sm:$0xff]
  %v36 = vld [vmem:[%s0 + $0x50] sm:$0xff]
  %v37 = vld [vmem:[%s0 + $0x58] sm:$0xff]
  %v38 = vld [vmem:[%s0 + $0x60] sm:$0xff]
  %v39 = vld [vmem:[%s0 + $0x68] sm:$0xff]
  %v40 = vld [vmem:[%s0 + $0x70] sm:$0xff]
  %v41 = vld [vmem:[%s0 + $0x78] sm:$0xff]
  %v42 = vld [vmem:[%s1] sm:$0xff]
  %v43 = vld [vmem:[%s1 + $0x8] sm:$0xff]
  %v44 = vld [vmem:[%s1 + $0x10] sm:$0xff]
  %v45 = vld [vmem:[%s1 + $0x18] sm:$0xff]
  %v46 = vld [vmem:[%s4] sm:$0x1]
  %v48 = vlaneseq
  %v49 = vshrl.u32 %v48, 7
  %v50 = vsub.s32 0, %v49
  %v51 = vrot.slane %v46, %v50
  %vm53 = vcmask 261120
  %v55 = vsel %vm53, %v26, 0
  %v58 = vsel %vm53, %v27, 0
  %v61 = vsel %vm53, %v28, 0
  %v64 = vsel %vm53, %v29, 0
  %v67 = vsel %vm53, %v30, 0
  %v70 = vsel %vm53, %v31, 0
  %v73 = vsel %vm53, %v32, 0
  %v76 = vsel %vm53, %v33, 0
  %v79 = vsel %vm53, %v34, 0
  %v82 = vsel %vm53, %v35, 0
  %v85 = vsel %vm53, %v36, 0
  %v88 = vsel %vm53, %v37, 0
  %v91 = vsel %vm53, %v38, 0
  %v94 = vsel %vm53, %v39, 0
  %v97 = vsel %vm53, %v40, 0
  %v100 = vsel %vm53, %v41, 0
  %102 = vmatprep.subr.mxu0 0.0
  %103 = vmatpush1.msra.mxu0 %v42
  %104 = vmatprep.subr.mxu0 0.0
  %105 = vmatpush1.msra.mxu0 %v43
  %106 = vmatprep.subr.mxu0 0.0
  %107 = vmatpush1.msra.mxu0 %v44
  %108 = vmatprep.subr.mxu0 0.0
  %109 = vmatpush1.msra.mxu0 %v45
  %110 = vmatprep.subr.mxu0 0.0
  %111 = vmatpush1.msra.mxu0 0.0
  %112 = vmatprep.subr.mxu0 0.0
  %113 = vmatpush1.msra.mxu0 0.0
  %114 = vmatprep.subr.mxu0 0.0
  %115 = vmatpush1.msra.mxu0 0.0
  %116 = vmatprep.subr.mxu0 0.0
  %117 = vmatpush1.msra.mxu0 0.0
  %118 = vmatprep.subr.mxu0 0.0
  %119 = vmatpush1.msra.mxu0 0.0
  %120 = vmatprep.subr.mxu0 0.0
  %121 = vmatpush1.msra.mxu0 0.0
  %122 = vmatprep.subr.mxu0 0.0
  %123 = vmatpush1.msra.mxu0 0.0
  %124 = vmatprep.subr.mxu0 0.0
  %125 = vmatpush1.msra.mxu0 0.0
  %126 = vmatprep.subr.mxu0 0.0
  %127 = vmatpush1.msra.mxu0 0.0
  %128 = vmatprep.subr.mxu0 0.0
  %129 = vmatpush1.msra.mxu0 0.0
  %130 = vmatprep.subr.mxu0 0.0
  %131 = vmatpush1.msra.mxu0 0.0
  %132 = vmatprep.subr.mxu0 0.0
  %133 = vmatpush1.msra.mxu0 0.0
  %134 = vmatprep.subr.mxu0 0.0
  %135 = vmatpush1.msra.mxu0 0.0
  %136 = vmatprep.subr.mxu0 0.0
  %137 = vmatpush1.msra.mxu0 0.0
  %138 = vmatprep.subr.mxu0 0.0
  %139 = vmatpush1.msra.mxu0 0.0
  %140 = vmatprep.subr.mxu0 0.0
  %141 = vmatpush1.msra.mxu0 0.0
  %142 = vmatprep.subr.mxu0 0.0
  %143 = vmatpush1.msra.mxu0 0.0
  %144 = vmatprep.subr.mxu0 0.0
  %145 = vmatpush1.msra.mxu0 0.0
  %146 = vmatprep.subr.mxu0 0.0
  %147 = vmatpush1.msra.mxu0 0.0
  %148 = vmatprep.subr.mxu0 0.0
  %149 = vmatpush1.msra.mxu0 0.0
  %150 = vmatprep.subr.mxu0 0.0
  %151 = vmatpush1.msra.mxu0 0.0
  %152 = vmatprep.subr.mxu0 0.0
  %153 = vmatpush1.msra.mxu0 0.0
  %154 = vmatprep.subr.mxu0 0.0
  %155 = vmatpush1.msra.mxu0 0.0
  %156 = vmatprep.subr.mxu0 0.0
  %157 = vmatpush1.msra.mxu0 0.0
  %158 = vmatprep.subr.mxu0 0.0
  %159 = vmatpush1.msra.mxu0 0.0
  %160 = vmatprep.subr.mxu0 0.0
  %161 = vmatpush1.msra.mxu0 0.0
  %162 = vmatprep.subr.mxu0 0.0
  %163 = vmatpush1.msra.mxu0 0.0
  %164 = vmatprep.subr.mxu0 0.0
  %165 = vmatpush1.msra.mxu0 0.0
  %166 = vmatprep.mubr.f32.mxu0 0.0
  %167 = vmatmul.mubr.f32.gmra.mrb[0].mxu0 %v55
  %v168 = vpop.f32.mrb[0].mxu0
  %v169 = vadd.f32 %v51, %v168
  %v170 = vpop.f32.mrb[0].mxu0
  %171 = vmatprep.mubr.f32.mxu0 0.0
  %172 = vmatmul.mubr.f32.gmra.mrb[0].mxu0 %v58
  %v173 = vpop.f32.mrb[0].mxu0
  %v174 = vadd.f32 %v51, %v173
  %v175 = vpop.f32.mrb[0].mxu0
  %176 = vmatprep.mubr.f32.mxu0 0.0
  %177 = vmatmul.mubr.f32.gmra.mrb[0].mxu0 %v61
  %v178 = vpop.f32.mrb[0].mxu0
  %v179 = vadd.f32 %v51, %v178
  %v180 = vpop.f32.mrb[0].mxu0
  %181 = vmatprep.mubr.f32.mxu0 0.0
  %182 = vmatmul.mubr.f32.gmra.mrb[0].mxu0 %v64
  %v183 = vpop.f32.mrb[0].mxu0
  %v184 = vadd.f32 %v51, %v183
  %v185 = vpop.f32.mrb[0].mxu0
  %186 = vmatprep.mubr.f32.mxu0 0.0
  %187 = vmatmul.mubr.f32.gmra.mrb[0].mxu0 %v67
  %v188 = vpop.f32.mrb[0].mxu0
  %v189 = vadd.f32 %v51, %v188
  %v190 = vpop.f32.mrb[0].mxu0
  %191 = vmatprep.mubr.f32.mxu0 0.0
  %192 = vmatmul.mubr.f32.gmra.mrb[0].mxu0 %v70
  %v193 = vpop.f32.mrb[0].mxu0
  %v194 = vadd.f32 %v51, %v193
  %v195 = vpop.f32.mrb[0].mxu0
  %196 = vmatprep.mubr.f32.mxu0 0.0
  %197 = vmatmul.mubr.f32.gmra.mrb[0].mxu0 %v73
  %v198 = vpop.f32.mrb[0].mxu0
  %v199 = vadd.f32 %v51, %v198
  %v200 = vpop.f32.mrb[0].mxu0
  %201 = vmatprep.mubr.f32.mxu0 0.0
  %202 = vmatmul.mubr.f32.gmra.mrb[0].mxu0 %v76
  %v203 = vpop.f32.mrb[0].mxu0
  %v204 = vadd.f32 %v51, %v203
  %v205 = vpop.f32.mrb[0].mxu0
  %206 = vmatprep.mubr.f32.mxu0 0.0
  %207 = vmatmul.mubr.f32.gmra.mrb[0].mxu0 %v79
  %v208 = vpop.f32.mrb[0].mxu0
  %v209 = vadd.f32 %v51, %v208
  %v210 = vpop.f32.mrb[0].mxu0
  %211 = vmatprep.mubr.f32.mxu0 0.0
  %212 = vmatmul.mubr.f32.gmra.mrb[0].mxu0 %v82
  %v213 = vpop.f32.mrb[0].mxu0
  %v214 = vadd.f32 %v51, %v213
  %v215 = vpop.f32.mrb[0].mxu0
  %216 = vmatprep.mubr.f32.mxu0 0.0
  %217 = vmatmul.mubr.f32.gmra.mrb[0].mxu0 %v85
  %v218 = vpop.f32.mrb[0].mxu0
  %v219 = vadd.f32 %v51, %v218
  %v220 = vpop.f32.mrb[0].mxu0
  %221 = vmatprep.mubr.f32.mxu0 0.0
  %222 = vmatmul.mubr.f32.gmra.mrb[0].mxu0 %v88
  %v223 = vpop.f32.mrb[0].mxu0
  %v224 = vadd.f32 %v51, %v223
  %v225 = vpop.f32.mrb[0].mxu0
  %226 = vmatprep.mubr.f32.mxu0 0.0
  %227 = vmatmul.mubr.f32.gmra.mrb[0].mxu0 %v91
  %v228 = vpop.f32.mrb[0].mxu0
  %v229 = vadd.f32 %v51, %v228
  %v230 = vpop.f32.mrb[0].mxu0
  %231 = vmatprep.mubr.f32.mxu0 0.0
  %232 = vmatmul.mubr.f32.gmra.mrb[0].mxu0 %v94
  %v233 = vpop.f32.mrb[0].mxu0
  %v234 = vadd.f32 %v51, %v233
  %v235 = vpop.f32.mrb[0].mxu0
  %236 = vmatprep.mubr.f32.mxu0 0.0
  %237 = vmatmul.mubr.f32.gmra.mrb[0].mxu0 %v97
  %v238 = vpop.f32.mrb[0].mxu0
  %v239 = vadd.f32 %v51, %v238
  %v240 = vpop.f32.mrb[0].mxu0
  %241 = vmatprep.mubr.f32.mxu0 0.0
  %242 = vmatmul.mubr.f32.gmra.mrb[0].mxu0 %v100
  %v243 = vpop.f32.mrb[0].mxu0
  %v244 = vadd.f32 %v51, %v243
  %v245 = vpop.f32.mrb[0].mxu0
  %246 = vdwg.mxu0
  %247 = vst.msk [vmem:[%s6] sm:$0xff] %vm53, %v169
  %248 = vst.msk [vmem:[%s6 + $0x8] sm:$0xff] %vm53, %v174
  %249 = vst.msk [vmem:[%s6 + $0x10] sm:$0xff] %vm53, %v179
  %250 = vst.msk [vmem:[%s6 + $0x18] sm:$0xff] %vm53, %v184
  %251 = vst.msk [vmem:[%s6 + $0x20] sm:$0xff] %vm53, %v189
  %252 = vst.msk [vmem:[%s6 + $0x28] sm:$0xff] %vm53, %v194
  %253 = vst.msk [vmem:[%s6 + $0x30] sm:$0xff] %vm53, %v199
  %254 = vst.msk [vmem:[%s6 + $0x38] sm:$0xff] %vm53, %v204
  %255 = vst.msk [vmem:[%s6 + $0x40] sm:$0xff] %vm53, %v209
  %256 = vst.msk [vmem:[%s6 + $0x48] sm:$0xff] %vm53, %v214
  %257 = vst.msk [vmem:[%s6 + $0x50] sm:$0xff] %vm53, %v219
  %258 = vst.msk [vmem:[%s6 + $0x58] sm:$0xff] %vm53, %v224
  %259 = vst.msk [vmem:[%s6 + $0x60] sm:$0xff] %vm53, %v229
  %260 = vst.msk [vmem:[%s6 + $0x68] sm:$0xff] %vm53, %v234
  %261 = vst.msk [vmem:[%s6 + $0x70] sm:$0xff] %vm53, %v239
  %262 = vst.msk [vmem:[%s6 + $0x78] sm:$0xff] %vm53, %v244
  %v263 = vld [vmem:[%s2] sm:$0xff]
  %v264 = vld [vmem:[%s2 + $0x8] sm:$0xff]
  %v265 = vld [vmem:[%s2 + $0x10] sm:$0xff]
  %v266 = vld [vmem:[%s2 + $0x18] sm:$0xff]
  %267 = vmatprep.subr.mxu0 0.0
  %268 = vmatpush1.msra.mxu0 %v263
  %269 = vmatprep.subr.mxu0 0.0
  %270 = vmatpush1.msra.mxu0 %v264
  %271 = vmatprep.subr.mxu0 0.0
  %272 = vmatpush1.msra.mxu0 %v265
  %273 = vmatprep.subr.mxu0 0.0
  %274 = vmatpush1.msra.mxu0 %v266
  %275 = vmatprep.subr.mxu0 0.0
  %276 = vmatpush1.msra.mxu0 0.0
  %277 = vmatprep.subr.mxu0 0.0
  %278 = vmatpush1.msra.mxu0 0.0
  %279 = vmatprep.subr.mxu0 0.0
  %280 = vmatpush1.msra.mxu0 0.0
  %281 = vmatprep.subr.mxu0 0.0
  %282 = vmatpush1.msra.mxu0 0.0
  %283 = vmatprep.subr.mxu0 0.0
  %284 = vmatpush1.msra.mxu0 0.0
  %285 = vmatprep.subr.mxu0 0.0
  %286 = vmatpush1.msra.mxu0 0.0
  %287 = vmatprep.subr.mxu0 0.0
  %288 = vmatpush1.msra.mxu0 0.0
  %289 = vmatprep.subr.mxu0 0.0
  %290 = vmatpush1.msra.mxu0 0.0
  %291 = vmatprep.subr.mxu0 0.0
  %292 = vmatpush1.msra.mxu0 0.0
  %293 = vmatprep.subr.mxu0 0.0
  %294 = vmatpush1.msra.mxu0 0.0
  %295 = vmatprep.subr.mxu0 0.0
  %296 = vmatpush1.msra.mxu0 0.0
  %297 = vmatprep.subr.mxu0 0.0
  %298 = vmatpush1.msra.mxu0 0.0
  %299 = vmatprep.subr.mxu0 0.0
  %300 = vmatpush1.msra.mxu0 0.0
  %301 = vmatprep.subr.mxu0 0.0
  %302 = vmatpush1.msra.mxu0 0.0
  %303 = vmatprep.subr.mxu0 0.0
  %304 = vmatpush1.msra.mxu0 0.0
  %305 = vmatprep.subr.mxu0 0.0
  %306 = vmatpush1.msra.mxu0 0.0
  %307 = vmatprep.subr.mxu0 0.0
  %308 = vmatpush1.msra.mxu0 0.0
  %309 = vmatprep.subr.mxu0 0.0
  %310 = vmatpush1.msra.mxu0 0.0
  %311 = vmatprep.subr.mxu0 0.0
  %312 = vmatpush1.msra.mxu0 0.0
  %313 = vmatprep.subr.mxu0 0.0
  %314 = vmatpush1.msra.mxu0 0.0
  %315 = vmatprep.subr.mxu0 0.0
  %316 = vmatpush1.msra.mxu0 0.0
  %317 = vmatprep.subr.mxu0 0.0
  %318 = vmatpush1.msra.mxu0 0.0
  %319 = vmatprep.subr.mxu0 0.0
  %320 = vmatpush1.msra.mxu0 0.0
  %321 = vmatprep.subr.mxu0 0.0
  %322 = vmatpush1.msra.mxu0 0.0
  %323 = vmatprep.subr.mxu0 0.0
  %324 = vmatpush1.msra.mxu0 0.0
  %325 = vmatprep.subr.mxu0 0.0
  %326 = vmatpush1.msra.mxu0 0.0
  %327 = vmatprep.subr.mxu0 0.0
  %328 = vmatpush1.msra.mxu0 0.0
  %329 = vmatprep.subr.mxu0 0.0
  %330 = vmatpush1.msra.mxu0 0.0
  %331 = vmatprep.mubr.f32.mxu0 0.0
  %332 = vmatmul.mubr.f32.gmra.mrb[0].mxu0 %v55
  %v333 = vpop.f32.mrb[0].mxu0
  %v334 = vadd.f32 0.0, %v333
  %v335 = vpop.f32.mrb[0].mxu0
  %336 = vmatprep.mubr.f32.mxu0 0.0
  %337 = vmatmul.mubr.f32.gmra.mrb[0].mxu0 %v58
  %v338 = vpop.f32.mrb[0].mxu0
  %v339 = vadd.f32 0.0, %v338
  %v340 = vpop.f32.mrb[0].mxu0
  %341 = vmatprep.mubr.f32.mxu0 0.0
  %342 = vmatmul.mubr.f32.gmra.mrb[0].mxu0 %v61
  %v343 = vpop.f32.mrb[0].mxu0
  %v344 = vadd.f32 0.0, %v343
  %v345 = vpop.f32.mrb[0].mxu0
  %346 = vmatprep.mubr.f32.mxu0 0.0
  %347 = vmatmul.mubr.f32.gmra.mrb[0].mxu0 %v64
  %v348 = vpop.f32.mrb[0].mxu0
  %v349 = vadd.f32 0.0, %v348
  %v350 = vpop.f32.mrb[0].mxu0
  %351 = vmatprep.mubr.f32.mxu0 0.0
  %352 = vmatmul.mubr.f32.gmra.mrb[0].mxu0 %v67
  %v353 = vpop.f32.mrb[0].mxu0
  %v354 = vadd.f32 0.0, %v353
  %v355 = vpop.f32.mrb[0].mxu0
  %356 = vmatprep.mubr.f32.mxu0 0.0
  %357 = vmatmul.mubr.f32.gmra.mrb[0].mxu0 %v70
  %v358 = vpop.f32.mrb[0].mxu0
  %v359 = vadd.f32 0.0, %v358
  %v360 = vpop.f32.mrb[0].mxu0
  %361 = vmatprep.mubr.f32.mxu0 0.0
  %362 = vmatmul.mubr.f32.gmra.mrb[0].mxu0 %v73
  %v363 = vpop.f32.mrb[0].mxu0
  %v364 = vadd.f32 0.0, %v363
  %v365 = vpop.f32.mrb[0].mxu0
  %366 = vmatprep.mubr.f32.mxu0 0.0
  %367 = vmatmul.mubr.f32.gmra.mrb[0].mxu0 %v76
  %v368 = vpop.f32.mrb[0].mxu0
  %v369 = vadd.f32 0.0, %v368
  %v370 = vpop.f32.mrb[0].mxu0
  %371 = vmatprep.mubr.f32.mxu0 0.0
  %372 = vmatmul.mubr.f32.gmra.mrb[0].mxu0 %v79
  %v373 = vpop.f32.mrb[0].mxu0
  %v374 = vadd.f32 0.0, %v373
  %v375 = vpop.f32.mrb[0].mxu0
  %376 = vmatprep.mubr.f32.mxu0 0.0
  %377 = vmatmul.mubr.f32.gmra.mrb[0].mxu0 %v82
  %v378 = vpop.f32.mrb[0].mxu0
  %v379 = vadd.f32 0.0, %v378
  %v380 = vpop.f32.mrb[0].mxu0
  %381 = vmatprep.mubr.f32.mxu0 0.0
  %382 = vmatmul.mubr.f32.gmra.mrb[0].mxu0 %v85
  %v383 = vpop.f32.mrb[0].mxu0
  %v384 = vadd.f32 0.0, %v383
  %v385 = vpop.f32.mrb[0].mxu0
  %386 = vmatprep.mubr.f32.mxu0 0.0
  %387 = vmatmul.mubr.f32.gmra.mrb[0].mxu0 %v88
  %v388 = vpop.f32.mrb[0].mxu0
  %v389 = vadd.f32 0.0, %v388
  %v390 = vpop.f32.mrb[0].mxu0
  %391 = vmatprep.mubr.f32.mxu0 0.0
  %392 = vmatmul.mubr.f32.gmra.mrb[0].mxu0 %v91
  %v393 = vpop.f32.mrb[0].mxu0
  %v394 = vadd.f32 0.0, %v393
  %v395 = vpop.f32.mrb[0].mxu0
  %396 = vmatprep.mubr.f32.mxu0 0.0
  %397 = vmatmul.mubr.f32.gmra.mrb[0].mxu0 %v94
  %v398 = vpop.f32.mrb[0].mxu0
  %v399 = vadd.f32 0.0, %v398
  %v400 = vpop.f32.mrb[0].mxu0
  %401 = vmatprep.mubr.f32.mxu0 0.0
  %402 = vmatmul.mubr.f32.gmra.mrb[0].mxu0 %v97
  %v403 = vpop.f32.mrb[0].mxu0
  %v404 = vadd.f32 0.0, %v403
  %v405 = vpop.f32.mrb[0].mxu0
  %406 = vmatprep.mubr.f32.mxu0 0.0
  %407 = vmatmul.mubr.f32.gmra.mrb[0].mxu0 %v100
  %v408 = vpop.f32.mrb[0].mxu0
  %v409 = vadd.f32 0.0, %v408
  %v410 = vpop.f32.mrb[0].mxu0
  %411 = vdwg.mxu0
  %412 = vst.msk [vmem:[%s7] sm:$0xff] %vm53, %v334
  %413 = vst.msk [vmem:[%s7 + $0x8] sm:$0xff] %vm53, %v339
  %414 = vst.msk [vmem:[%s7 + $0x10] sm:$0xff] %vm53, %v344
  %415 = vst.msk [vmem:[%s7 + $0x18] sm:$0xff] %vm53, %v349
  %416 = vst.msk [vmem:[%s7 + $0x20] sm:$0xff] %vm53, %v354
  %417 = vst.msk [vmem:[%s7 + $0x28] sm:$0xff] %vm53, %v359
  %418 = vst.msk [vmem:[%s7 + $0x30] sm:$0xff] %vm53, %v364
  %419 = vst.msk [vmem:[%s7 + $0x38] sm:$0xff] %vm53, %v369
  %420 = vst.msk [vmem:[%s7 + $0x40] sm:$0xff] %vm53, %v374
  %421 = vst.msk [vmem:[%s7 + $0x48] sm:$0xff] %vm53, %v379
  %422 = vst.msk [vmem:[%s7 + $0x50] sm:$0xff] %vm53, %v384
  %423 = vst.msk [vmem:[%s7 + $0x58] sm:$0xff] %vm53, %v389
  %424 = vst.msk [vmem:[%s7 + $0x60] sm:$0xff] %vm53, %v394
  %425 = vst.msk [vmem:[%s7 + $0x68] sm:$0xff] %vm53, %v399
  %426 = vst.msk [vmem:[%s7 + $0x70] sm:$0xff] %vm53, %v404
  %427 = vst.msk [vmem:[%s7 + $0x78] sm:$0xff] %vm53, %v409
  %v428 = vld [vmem:[%s3] sm:$0xff]
  %v429 = vld [vmem:[%s3 + $0x8] sm:$0xff]
  %v430 = vld [vmem:[%s3 + $0x10] sm:$0xff]
  %v431 = vld [vmem:[%s3 + $0x18] sm:$0xff]
  %v432 = vld [vmem:[%s5] sm:$0x1]
  %v434 = vlaneseq
  %v435 = vshrl.u32 %v434, 7
  %v436 = vsub.s32 0, %v435
  %v437 = vrot.slane %v432, %v436
  %439 = vmatprep.subr.mxu0 0.0
  %440 = vmatpush1.msra.mxu0 %v428
  %441 = vmatprep.subr.mxu0 0.0
  %442 = vmatpush1.msra.mxu0 %v429
  %443 = vmatprep.subr.mxu0 0.0
  %444 = vmatpush1.msra.mxu0 %v430
  %445 = vmatprep.subr.mxu0 0.0
  %446 = vmatpush1.msra.mxu0 %v431
  %447 = vmatprep.subr.mxu0 0.0
  %448 = vmatpush1.msra.mxu0 0.0
  %449 = vmatprep.subr.mxu0 0.0
  %450 = vmatpush1.msra.mxu0 0.0
  %451 = vmatprep.subr.mxu0 0.0
  %452 = vmatpush1.msra.mxu0 0.0
  %453 = vmatprep.subr.mxu0 0.0
  %454 = vmatpush1.msra.mxu0 0.0
  %455 = vmatprep.subr.mxu0 0.0
  %456 = vmatpush1.msra.mxu0 0.0
  %457 = vmatprep.subr.mxu0 0.0
  %458 = vmatpush1.msra.mxu0 0.0
  %459 = vmatprep.subr.mxu0 0.0
  %460 = vmatpush1.msra.mxu0 0.0
  %461 = vmatprep.subr.mxu0 0.0
  %462 = vmatpush1.msra.mxu0 0.0
  %463 = vmatprep.subr.mxu0 0.0
  %464 = vmatpush1.msra.mxu0 0.0
  %465 = vmatprep.subr.mxu0 0.0
  %466 = vmatpush1.msra.mxu0 0.0
  %467 = vmatprep.subr.mxu0 0.0
  %468 = vmatpush1.msra.mxu0 0.0
  %469 = vmatprep.subr.mxu0 0.0
  %470 = vmatpush1.msra.mxu0 0.0
  %471 = vmatprep.subr.mxu0 0.0
  %472 = vmatpush1.msra.mxu0 0.0
  %473 = vmatprep.subr.mxu0 0.0
  %474 = vmatpush1.msra.mxu0 0.0
  %475 = vmatprep.subr.mxu0 0.0
  %476 = vmatpush1.msra.mxu0 0.0
  %477 = vmatprep.subr.mxu0 0.0
  %478 = vmatpush1.msra.mxu0 0.0
  %479 = vmatprep.subr.mxu0 0.0
  %480 = vmatpush1.msra.mxu0 0.0
  %481 = vmatprep.subr.mxu0 0.0
  %482 = vmatpush1.msra.mxu0 0.0
  %483 = vmatprep.subr.mxu0 0.0
  %484 = vmatpush1.msra.mxu0 0.0
  %485 = vmatprep.subr.mxu0 0.0
  %486 = vmatpush1.msra.mxu0 0.0
  %487 = vmatprep.subr.mxu0 0.0
  %488 = vmatpush1.msra.mxu0 0.0
  %489 = vmatprep.subr.mxu0 0.0
  %490 = vmatpush1.msra.mxu0 0.0
  %491 = vmatprep.subr.mxu0 0.0
  %492 = vmatpush1.msra.mxu0 0.0
  %493 = vmatprep.subr.mxu0 0.0
  %494 = vmatpush1.msra.mxu0 0.0
  %495 = vmatprep.subr.mxu0 0.0
  %496 = vmatpush1.msra.mxu0 0.0
  %497 = vmatprep.subr.mxu0 0.0
  %498 = vmatpush1.msra.mxu0 0.0
  %499 = vmatprep.subr.mxu0 0.0
  %500 = vmatpush1.msra.mxu0 0.0
  %501 = vmatprep.subr.mxu0 0.0
  %502 = vmatpush1.msra.mxu0 0.0
  %503 = vmatprep.mubr.f32.mxu0 0.0
  %504 = vmatmul.mubr.f32.gmra.mrb[0].mxu0 %v55
  %v505 = vpop.f32.mrb[0].mxu0
  %v506 = vadd.f32 %v437, %v505
  %v507 = vpop.f32.mrb[0].mxu0
  %508 = vmatprep.mubr.f32.mxu0 0.0
  %509 = vmatmul.mubr.f32.gmra.mrb[0].mxu0 %v58
  %v510 = vpop.f32.mrb[0].mxu0
  %v511 = vadd.f32 %v437, %v510
  %v512 = vpop.f32.mrb[0].mxu0
  %513 = vmatprep.mubr.f32.mxu0 0.0
  %514 = vmatmul.mubr.f32.gmra.mrb[0].mxu0 %v61
  %v515 = vpop.f32.mrb[0].mxu0
  %v516 = vadd.f32 %v437, %v515
  %v517 = vpop.f32.mrb[0].mxu0
  %518 = vmatprep.mubr.f32.mxu0 0.0
  %519 = vmatmul.mubr.f32.gmra.mrb[0].mxu0 %v64
  %v520 = vpop.f32.mrb[0].mxu0
  %v521 = vadd.f32 %v437, %v520
  %v522 = vpop.f32.mrb[0].mxu0
  %523 = vmatprep.mubr.f32.mxu0 0.0
  %524 = vmatmul.mubr.f32.gmra.mrb[0].mxu0 %v67
  %v525 = vpop.f32.mrb[0].mxu0
  %v526 = vadd.f32 %v437, %v525
  %v527 = vpop.f32.mrb[0].mxu0
  %528 = vmatprep.mubr.f32.mxu0 0.0
  %529 = vmatmul.mubr.f32.gmra.mrb[0].mxu0 %v70
  %v530 = vpop.f32.mrb[0].mxu0
  %v531 = vadd.f32 %v437, %v530
  %v532 = vpop.f32.mrb[0].mxu0
  %533 = vmatprep.mubr.f32.mxu0 0.0
  %534 = vmatmul.mubr.f32.gmra.mrb[0].mxu0 %v73
  %v535 = vpop.f32.mrb[0].mxu0
  %v536 = vadd.f32 %v437, %v535
  %v537 = vpop.f32.mrb[0].mxu0
  %538 = vmatprep.mubr.f32.mxu0 0.0
  %539 = vmatmul.mubr.f32.gmra.mrb[0].mxu0 %v76
  %v540 = vpop.f32.mrb[0].mxu0
  %v541 = vadd.f32 %v437, %v540
  %v542 = vpop.f32.mrb[0].mxu0
  %543 = vmatprep.mubr.f32.mxu0 0.0
  %544 = vmatmul.mubr.f32.gmra.mrb[0].mxu0 %v79
  %v545 = vpop.f32.mrb[0].mxu0
  %v546 = vadd.f32 %v437, %v545
  %v547 = vpop.f32.mrb[0].mxu0
  %548 = vmatprep.mubr.f32.mxu0 0.0
  %549 = vmatmul.mubr.f32.gmra.mrb[0].mxu0 %v82
  %v550 = vpop.f32.mrb[0].mxu0
  %v551 = vadd.f32 %v437, %v550
  %v552 = vpop.f32.mrb[0].mxu0
  %553 = vmatprep.mubr.f32.mxu0 0.0
  %554 = vmatmul.mubr.f32.gmra.mrb[0].mxu0 %v85
  %v555 = vpop.f32.mrb[0].mxu0
  %v556 = vadd.f32 %v437, %v555
  %v557 = vpop.f32.mrb[0].mxu0
  %558 = vmatprep.mubr.f32.mxu0 0.0
  %559 = vmatmul.mubr.f32.gmra.mrb[0].mxu0 %v88
  %v560 = vpop.f32.mrb[0].mxu0
  %v561 = vadd.f32 %v437, %v560
  %v562 = vpop.f32.mrb[0].mxu0
  %563 = vmatprep.mubr.f32.mxu0 0.0
  %564 = vmatmul.mubr.f32.gmra.mrb[0].mxu0 %v91
  %v565 = vpop.f32.mrb[0].mxu0
  %v566 = vadd.f32 %v437, %v565
  %v567 = vpop.f32.mrb[0].mxu0
  %568 = vmatprep.mubr.f32.mxu0 0.0
  %569 = vmatmul.mubr.f32.gmra.mrb[0].mxu0 %v94
  %v570 = vpop.f32.mrb[0].mxu0
  %v571 = vadd.f32 %v437, %v570
  %v572 = vpop.f32.mrb[0].mxu0
  %573 = vmatprep.mubr.f32.mxu0 0.0
  %574 = vmatmul.mubr.f32.gmra.mrb[0].mxu0 %v97
  %v575 = vpop.f32.mrb[0].mxu0
  %v576 = vadd.f32 %v437, %v575
  %v577 = vpop.f32.mrb[0].mxu0
  %578 = vmatprep.mubr.f32.mxu0 0.0
  %579 = vmatmul.mubr.f32.gmra.mrb[0].mxu0 %v100
  %v580 = vpop.f32.mrb[0].mxu0
  %v581 = vadd.f32 %v437, %v580
  %v582 = vpop.f32.mrb[0].mxu0
  %583 = vdwg.mxu0
  %584 = vst.msk [vmem:[%s8] sm:$0xff] %vm53, %v506
  %585 = vst.msk [vmem:[%s8 + $0x8] sm:$0xff] %vm53, %v511
  %586 = vst.msk [vmem:[%s8 + $0x10] sm:$0xff] %vm53, %v516
  %587 = vst.msk [vmem:[%s8 + $0x18] sm:$0xff] %vm53, %v521
  %588 = vst.msk [vmem:[%s8 + $0x20] sm:$0xff] %vm53, %v526
  %589 = vst.msk [vmem:[%s8 + $0x28] sm:$0xff] %vm53, %v531
  %590 = vst.msk [vmem:[%s8 + $0x30] sm:$0xff] %vm53, %v536
  %591 = vst.msk [vmem:[%s8 + $0x38] sm:$0xff] %vm53, %v541
  %592 = vst.msk [vmem:[%s8 + $0x40] sm:$0xff] %vm53, %v546
  %593 = vst.msk [vmem:[%s8 + $0x48] sm:$0xff] %vm53, %v551
  %594 = vst.msk [vmem:[%s8 + $0x50] sm:$0xff] %vm53, %v556
  %595 = vst.msk [vmem:[%s8 + $0x58] sm:$0xff] %vm53, %v561
  %596 = vst.msk [vmem:[%s8 + $0x60] sm:$0xff] %vm53, %v566
  %597 = vst.msk [vmem:[%s8 + $0x68] sm:$0xff] %vm53, %v571
  %598 = vst.msk [vmem:[%s8 + $0x70] sm:$0xff] %vm53, %v576
  %599 = vst.msk [vmem:[%s8 + $0x78] sm:$0xff] %vm53, %v581
  // Predicated region
  $region26: #{tpu_custom_call.1} parent=0 // pred_check
    _
  $region27: #{tpu_custom_call.1} parent=0 // pred_check_branch
    %601 = sbr.rel (0) target = $region29
  $region28: #{tpu_custom_call.1} parent=0 // pred_region
    _
  $region29: #{tpu_custom_call.1} parent=0 // pred_fallthru
    _
  // Predicated region
  $region30: #{tpu_custom_call.1} parent=0 // pred_check
    _
  $region31: #{tpu_custom_call.1} parent=0 // pred_check_branch
    %603 = sbr.rel (0) target = $region33
  $region32: #{tpu_custom_call.1} parent=0 // pred_region
    _
  $region33: #{tpu_custom_call.1} parent=0 // pred_fallthru
    _
  // Predicated region
  $region34: #{tpu_custom_call.1} parent=0 // pred_check
    _
  $region35: #{tpu_custom_call.1} parent=0 // pred_check_branch
    %605 = sbr.rel (0) target = $region37
  $region36: #{tpu_custom_call.1} parent=0 // pred_region
    _
  $region37: #{tpu_custom_call.1} parent=0 // pred_fallthru
    _
  // Predicated region
  $region38: #{tpu_custom_call.1} parent=0 // pred_check
    _
  $region39: #{tpu_custom_call.1} parent=0 // pred_check_branch
    %607 = sbr.rel (0) target = $region41
  $region40: #{tpu_custom_call.1} parent=0 // pred_region
    _
  $region41: #{tpu_custom_call.1} parent=0 // pred_fallthru
    _
  // Predicated region
  $region42: #{tpu_custom_call.1} parent=0 // pred_check
    _
  $region43: #{tpu_custom_call.1} parent=0 // pred_check_branch
    %609 = sbr.rel (0) target = $region45
  $region44: #{tpu_custom_call.1} parent=0 // pred_region
    _
  $region45: #{tpu_custom_call.1} parent=0 // pred_fallthru
    _
  // Predicated region
  $region46: #{tpu_custom_call.1} parent=0 // pred_check
    _
  $region47: #{tpu_custom_call.1} parent=0 // pred_check_branch
    %611 = sbr.rel (0) target = $region49
  $region48: #{tpu_custom_call.1} parent=0 // pred_region
    _
  $region49: #{tpu_custom_call.1} parent=0 // pred_fallthru
    _

</llo_original>
